<compile_context>
chip_gen: v6e
topology: v6e:2x2x1
jax: 0.10.0
libtpu: 0.0.40
codegen_flags: <defaults>
</compile_context>

<pallas_src>
import functools

import jax
import jax.numpy as jnp
from jax import lax
from jax.experimental import pallas as pl
from jax.experimental.pallas import tpu as pltpu


def _conv_kernel(p_ref, w_ref, b_ref, o_ref):
    """One lane-dense chunk of the fused batch per grid step.

    p_ref: (9*Cin, lane_blk)  bf16  im2col patches (channel-major tap order)
    w_ref: (Cout, 9*Cin)      bf16  shared weights
    b_ref: (Cout, 1)          f32   shared bias
    o_ref: (Cout, lane_blk)   bf16  lane-dense output slab (lane_blk % 128 == 0)
    """
    acc = jnp.dot(w_ref[...], p_ref[...], preferred_element_type=jnp.float32)
    o_ref[...] = (acc + b_ref[...]).astype(o_ref.dtype)


def _conv3x3_fused(patches, w2, b2, *, steps, out_dtype=jnp.bfloat16):
    """patches: (9*Cin, Bt*H*W) bf16 -> (Cout, Bt*H*W) out_dtype."""
    K, n_total = patches.shape
    cout = w2.shape[0]
    lane_blk = n_total // steps
    return pl.pallas_call(
        _conv_kernel,
        out_shape=jax.ShapeDtypeStruct((cout, n_total), out_dtype),
        grid_spec=pltpu.PrefetchScalarGridSpec(
            num_scalar_prefetch=0,
            grid=(steps,),
            in_specs=[
                # Sublane dim == full array dim (K), lane dim multiple of 128.
                pl.BlockSpec((K, lane_blk), lambda s: (0, s)),
                pl.BlockSpec((cout, K), lambda s: (0, 0)),
                pl.BlockSpec((cout, 1), lambda s: (0, 0)),
            ],
            out_specs=pl.BlockSpec((cout, lane_blk), lambda s: (0, s)),
        ),
        compiler_params=pltpu.CompilerParams(
            dimension_semantics=("parallel",),   # 2 steps -> both v7x TCs
        ),
    )(patches, w2, b2)


@functools.partial(jax.jit, static_argnames=("steps",))
def _module_parallel_forward(x_all, w2, b2, *, steps):
    """x_all: (Bt, Cin, H, W) f32 -> (Bt, Cout, H, W) bf16 (shared conv)."""
    Bt, cin, H, W = x_all.shape
    cout = w2.shape[0]
    HW = H * W

    x_bf = x_all.astype(jnp.bfloat16)
    # Wrapper-side im2col (one fused XLA op).  Output channel ordering is
    # channel-major, filter-position-minor: index = ci*9 + kh*3 + kw, which
    # matches weight.reshape(Cout, Cin*9) of the PyTorch (O, I, kh, kw) layout.
    patches = lax.conv_general_dilated_patches(
        x_bf, (3, 3), (1, 1), ((1, 1), (1, 1)),
        dimension_numbers=("NCHW", "OIHW", "NCHW"))          # (Bt, 9*Cin, H, W)
    # Lay the fused batch along the lane axis: (9*Cin, Bt*H*W).
    patches = patches.reshape(Bt, 9 * cin, HW)
    patches = jnp.transpose(patches, (1, 0, 2)).reshape(9 * cin, Bt * HW)

    y = _conv3x3_fused(patches, w2, b2, steps=steps)          # (Cout, Bt*HW) bf16

    # Back to NCHW (pure layout plumbing, fused by XLA).
    y = y.reshape(cout, Bt, HW)
    y = jnp.transpose(y, (1, 0, 2)).reshape(Bt, cout, H, W)
    return y


class ModuleParallelPallas:
    """Pallas equivalent of ModuleParallel(nn.Conv2d(Cin, Cout, 3, padding=1)).

    "module0" and "module1" are the same shared parameters (the PyTorch module
    setattr's the identical module object twice), so both parallel streams are
    run through one fused pallas_call with a single copy of the weights.
    """

    def __init__(self, cin, cout, key):
        kw_key, kb_key = jax.random.split(key)
        fan_in = cin * 3 * 3
        bound = float(1.0 / (fan_in ** 0.5))
        # PyTorch Conv2d layout: (Cout, Cin, kh, kw)
        self.weight = jax.random.uniform(
            kw_key, (cout, cin, 3, 3), jnp.float32, -bound, bound)
        self.bias = jax.random.uniform(
            kb_key, (cout,), jnp.float32, -bound, bound)
        # Kernel-ready shared parameters, prepared ONCE:
        # (Cout, Cin*9) with tap order (ci, kh, kw) -- matches
        # conv_general_dilated_patches channel ordering; bf16 for the MXU.
        self.w2 = self.weight.reshape(cout, cin * 9).astype(jnp.bfloat16)
        self.b2 = self.bias.reshape(cout, 1).astype(jnp.float32)
        self.cin, self.cout = cin, cout

    def __call__(self, x_parallel):
        # ModuleParallel applies the SAME shared module to every stream ->
        # fuse the streams along batch and launch the kernel exactly once.
        n = len(x_parallel)
        assert len({tuple(x.shape) for x in x_parallel}) == 1, \
            "fused parallel streams must share a shape"
        B, C, H, W = x_parallel[0].shape
        assert C == self.cin
        Bt = n * B
        HW = H * W

        # Grid sizing: 2 parallel steps (both v7x TCs; ~1 extra ~0.35us step on
        # single-TC v5e/v6e), chunk further only if the per-step lane width
        # would blow the register file, and fall back to 1 step if the lane
        # block would violate the 128-lane divisibility rule.
        steps = 2 if Bt % 2 == 0 else 1
        while Bt % (steps * 2) == 0 and (Bt // steps) * HW > 4096:
            steps *= 2
        if steps > 1 and ((Bt // steps) * HW) % 128 != 0:
            steps = 1

        x_all = jnp.concatenate(x_parallel, axis=0)           # (Bt, C, H, W)
        y = _module_parallel_forward(x_all, self.w2, self.b2, steps=steps)
        # bf16 outputs (downstream consumers of the bf16 pipeline accept bf16;
        # halves the kernel's HBM writeback).
        return [y[i * B:(i + 1) * B] for i in range(n)]


def _reference_conv(x_nchw, weight_oihw, bias):
    # Plain-JAX reference (NCHW in/out), exact f32 path.
    y = lax.conv_general_dilated(
        x_nchw, weight_oihw,
        window_strides=(1, 1), padding=((1, 1), (1, 1)),
        dimension_numbers=("NCHW", "OIHW", "NCHW"),
        precision=lax.Precision.HIGHEST,
    )
    return y + bias.reshape(1, -1, 1, 1)


if __name__ == "__main__":
    key = jax.random.PRNGKey(0)
    k_mod, k_x0, k_x1 = jax.random.split(key, 3)

    N, C, Hs, Ws = 2, 4, 16, 16
    x0 = jax.random.normal(k_x0, (N, C, Hs, Ws), jnp.float32)
    x1 = jax.random.normal(k_x1, (N, C, Hs, Ws), jnp.float32)
    x_parallel = [x0, x1]

    mod = ModuleParallelPallas(cin=C, cout=C, key=k_mod)

    outs = mod(x_parallel)
    outs = [jax.block_until_ready(o) for o in outs]

    # Validate against a plain-JAX conv reference.  The kernel computes in
    # bf16 with f32 accumulation and stores bf16, so the reference uses the
    # same bf16-rounded inputs/weights and the tolerance covers the final
    # bf16 rounding of the output.
    w_bf = mod.weight.astype(jnp.bfloat16).astype(jnp.float32)
    for x_in, y_out in zip(x_parallel, outs):
        x_bf = x_in.astype(jnp.bfloat16).astype(jnp.float32)
        y_ref = _reference_conv(x_bf, w_bf, mod.bias)
        y_out_f = y_out.astype(jnp.float32)
        assert y_out.shape == y_ref.shape == (N, C, Hs, Ws)
        assert jnp.allclose(y_out_f, y_ref, atol=2e-2, rtol=2e-2), \
            float(jnp.max(jnp.abs(y_out_f - y_ref)))

    print("KERNEL_OK")
</pallas_src>

<mosaic_0001>
module attributes {stable_mosaic.version = 11 : i64} {
  func.func @_conv_kernel(%arg0: i32, %arg1: memref<36x512xbf16, #tpu.memory_space<vmem>>, %arg2: memref<4x36xbf16, #tpu.memory_space<vmem>>, %arg3: memref<4x1xf32, #tpu.memory_space<vmem>>, %arg4: memref<4x512xbf16, #tpu.memory_space<vmem>>) attributes {dimension_semantics = [#tpu.dimension_semantics<parallel>], iteration_bounds = array<i64: 2>, scalar_prefetch = 0 : i64, scratch_operands = 0 : i64, tpu.core_type = #tpu.core_type<tc>, window_params = [{transform_indices = @transform_0, window_bounds = array<i64: 36, 512>}, {pipeline_mode = #tpu.pipeline_mode<synchronous>, transform_indices = @transform_1, window_bounds = array<i64: 4, 36>}, {pipeline_mode = #tpu.pipeline_mode<synchronous>, transform_indices = @transform_2, window_bounds = array<i64: 4, 1>}, {transform_indices = @transform_3, window_bounds = array<i64: 4, 512>}]} {
    %c0 = arith.constant 0 : index
    %c0_0 = arith.constant 0 : index
    %0 = vector.load %arg2[%c0, %c0_0] : memref<4x36xbf16, #tpu.memory_space<vmem>>, vector<4x36xbf16>
    %c0_1 = arith.constant 0 : index
    %c0_2 = arith.constant 0 : index
    %1 = vector.load %arg1[%c0_1, %c0_2] : memref<36x512xbf16, #tpu.memory_space<vmem>>, vector<36x512xbf16>
    %cst = arith.constant dense<0.000000e+00> : vector<4x512xf32>
    %2 = tpu.matmul %0, %1, %cst {dimension_numbers = #tpu.dot_dimension_numbers<[1], [0], [0], [1], [0, 0, 1, 1], [], []>} : vector<4x36xbf16>, vector<36x512xbf16>, vector<4x512xf32> -> vector<4x512xf32>
    %c0_3 = arith.constant 0 : index
    %c0_4 = arith.constant 0 : index
    %3 = vector.load %arg3[%c0_3, %c0_4] : memref<4x1xf32, #tpu.memory_space<vmem>>, vector<4x1xf32>
    %4 = vector.broadcast %3 : vector<4x1xf32> to vector<4x512xf32>
    %5 = arith.addf %2, %4 : vector<4x512xf32>
    %6 = arith.truncf %5 : vector<4x512xf32> to vector<4x512xbf16>
    %c0_5 = arith.constant 0 : index
    %c0_6 = arith.constant 0 : index
    %7 = vector.load %arg4[%c0_5, %c0_6] : memref<4x512xbf16, #tpu.memory_space<vmem>>, vector<4x512xbf16>
    tpu.vector_store %arg4[%c0_5, %c0_6], %6 {strides = array<i32>} : memref<4x512xbf16, #tpu.memory_space<vmem>>, vector<4x512xbf16>,
    return
  }
  func.func @transform_0(%arg0: i32) -> (i32, i32) {
    %c0_i32 = arith.constant 0 : i32
    %c0_i32_0 = arith.constant 0 : i32
    return %c0_i32, %arg0 : i32, i32
  }
  func.func @transform_1(%arg0: i32) -> (i32, i32) {
    %c0_i32 = arith.constant 0 : i32
    %c0_i32_0 = arith.constant 0 : i32
    %c0_i32_1 = arith.constant 0 : i32
    return %c0_i32, %c0_i32_0 : i32, i32
  }
  func.func @transform_2(%arg0: i32) -> (i32, i32) {
    %c0_i32 = arith.constant 0 : i32
    %c0_i32_0 = arith.constant 0 : i32
    %c0_i32_1 = arith.constant 0 : i32
    return %c0_i32, %c0_i32_0 : i32, i32
  }
  func.func @transform_3(%arg0: i32) -> (i32, i32) {
    %c0_i32 = arith.constant 0 : i32
    %c0_i32_0 = arith.constant 0 : i32
    return %c0_i32, %arg0 : i32, i32
  }
}

</mosaic_0001>

<llo_original>
// kernel: _module_parallel_forward.1
$region0: #{_module_parallel_forward.1}
  #allocation0 [shape = 'u32[]', space=smem, size = 0x4, offset = 0x4, fixed_abs, tag = 'smem constant byte address 0x4 - core index']
  #allocation1 [shape = 'u32[144,128]{1,0:T(1,128)}', space=vmem, size = 0x12000, scoped, tag = 'internal scratch']
  %s0 = inlined_call_operand.vmem [shape: bf16[36,1024], index: 0, kind: input, shape index: {}]
  %s1 = inlined_call_operand.vmem [shape: bf16[4,36], index: 1, kind: input, shape index: {}]
  %s2 = inlined_call_operand.vmem [shape: f32[4,1], index: 2, kind: input, shape index: {}]
  %s3 = inlined_call_operand.vmem [shape: bf16[4,1024], index: 3, kind: output, shape index: {}]
  %s4 = sld [smem:[#allocation0]]
  $region68: #{_module_parallel_forward.1} parent=0
    _
  %s6 = ssub.s32 1, %s4
  %s7 = scalar_select 0, %s6, %s4
  $region1: #{_module_parallel_forward.1} parent=0
    #allocation2 [shape = 'u8[81920]{0}', space=vmem, size = 0x14000, scoped, tag = 'input window, operand 0']
    loop: start=0, step=1, limit=4
    $region2: #{_module_parallel_forward.1} parent=1 // loop_pre_header
      _
    $region3: #{_module_parallel_forward.1} parent=1 // loop_header
      %s9 = sphi 0, %s13
      %p10 = scmp.ge.s32.totalorder %s9, 4
      %s19 = sphi 0, %s21
      %s22 = sphi 0, %s19
      %s23 = sphi 0, %s22
      %s39 = sphi 0, %s23
      %s43 = sphi 0, %s43
      %s45 = sphi 0, %s43
      %s46 = sphi 0, %s45
      %s60 = sphi 0, %s46
      %s64 = sphi 0, %s64
      %s66 = sphi 0, %s64
      %s67 = sphi 0, %s66
      %s81 = sphi 0, %s67
      %s87 = sphi 0, %s89
      %s90 = sphi 0, %s87
      %s91 = sphi 0, %s90
      %s107 = sphi 0, %s91
    $region4: #{_module_parallel_forward.1} parent=1 // loop_header_branch
      %12 = sbr.rel (%p10) target = $region8
    $region5: #{_module_parallel_forward.1} parent=1 // loop_body
      %s14 = ssub.s32 %s9, 1
      %s15 = ssub.s32 %s9, 2
      %s16 = sadd.s32 %s9, 1
      %s17 = ssub.s32 %s9, %s16
      %p18 = scmp.eq.s32.totalorder %s17, 0
      %s20 = sadd.s32 %s19, 1
      %s21 = scalar_select %p18, %s19, %s20
      %p24 = pneg %p18
      %p25 = scmp.eq.s32.totalorder %s9, 1
      %p26 = por %p24, %p25
      %p27 = scmp.ne.s32.totalorder %s19, %s22
      %p28 = scmp.eq.s32.totalorder %s9, 0
      %p29 = por %p27, %p28
      %p30 = scmp.ne.s32.totalorder %s19, %s22
      %p31 = scmp.eq.s32.totalorder %s14, 1
      %p32 = por %p30, %p31
      %p33 = scmp.ne.s32.totalorder %s22, %s23
      %p34 = scmp.eq.s32.totalorder %s14, 0
      %p35 = por %p33, %p34
      %p36 = scmp.ne.s32.totalorder %s22, %s23
      %p37 = scmp.eq.s32.totalorder %s15, 1
      %p38 = por %p36, %p37
      %p40 = scmp.ne.s32.totalorder %s23, %s39
      %p41 = scmp.eq.s32.totalorder %s15, 0
      %p42 = por %p40, %p41
      %s44 = sadd.s32 %s43, 1
      %p47 = scmp.eq.s32.totalorder %s9, 1
      %p48 = scmp.ne.s32.totalorder %s43, %s45
      %p49 = scmp.eq.s32.totalorder %s9, 0
      %p50 = por %p48, %p49
      %p51 = scmp.ne.s32.totalorder %s43, %s45
      %p52 = scmp.eq.s32.totalorder %s14, 1
      %p53 = por %p51, %p52
      %p54 = scmp.ne.s32.totalorder %s45, %s46
      %p55 = scmp.eq.s32.totalorder %s14, 0
      %p56 = por %p54, %p55
      %p57 = scmp.ne.s32.totalorder %s45, %s46
      %p58 = scmp.eq.s32.totalorder %s15, 1
      %p59 = por %p57, %p58
      %p61 = scmp.ne.s32.totalorder %s46, %s60
      %p62 = scmp.eq.s32.totalorder %s15, 0
      %p63 = por %p61, %p62
      %s65 = sadd.s32 %s64, 1
      %p68 = scmp.eq.s32.totalorder %s9, 1
      %p69 = scmp.ne.s32.totalorder %s64, %s66
      %p70 = scmp.eq.s32.totalorder %s9, 0
      %p71 = por %p69, %p70
      %p72 = scmp.ne.s32.totalorder %s64, %s66
      %p73 = scmp.eq.s32.totalorder %s14, 1
      %p74 = por %p72, %p73
      %p75 = scmp.ne.s32.totalorder %s66, %s67
      %p76 = scmp.eq.s32.totalorder %s14, 0
      %p77 = por %p75, %p76
      %p78 = scmp.ne.s32.totalorder %s66, %s67
      %p79 = scmp.eq.s32.totalorder %s15, 1
      %p80 = por %p78, %p79
      %p82 = scmp.ne.s32.totalorder %s67, %s81
      %p83 = scmp.eq.s32.totalorder %s15, 0
      %p84 = por %p82, %p83
      %s85 = ssub.s32 %s9, %s16
      %p86 = scmp.eq.s32.totalorder %s85, 0
      %s88 = sadd.s32 %s87, 1
      %s89 = scalar_select %p86, %s87, %s88
      %p92 = pneg %p86
      %p93 = scmp.eq.s32.totalorder %s9, 1
      %p94 = por %p92, %p93
      %p95 = scmp.ne.s32.totalorder %s87, %s90
      %p96 = scmp.eq.s32.totalorder %s9, 0
      %p97 = por %p95, %p96
      %p98 = scmp.ne.s32.totalorder %s87, %s90
      %p99 = scmp.eq.s32.totalorder %s14, 1
      %p100 = por %p98, %p99
      %p101 = scmp.ne.s32.totalorder %s90, %s91
      %p102 = scmp.eq.s32.totalorder %s14, 0
      %p103 = por %p101, %p102
      %p104 = scmp.ne.s32.totalorder %s90, %s91
      %p105 = scmp.eq.s32.totalorder %s15, 1
      %p106 = por %p104, %p105
      %p108 = scmp.ne.s32.totalorder %s91, %s107
      %p109 = scmp.eq.s32.totalorder %s15, 0
      %p110 = por %p108, %p109
      %p111 = scmp.le.s32.totalorder 1, %s9
      %p112 = scmp.lt.s32.totalorder %s9, 3
      %p113 = pnand %p111, %p112
      %p114 = pneg %p113
      // Predicated region
      $region9: #{_module_parallel_forward.1} parent=5 // pred_check
        _
      $region10: #{_module_parallel_forward.1} parent=5 // pred_check_branch
        %116 = sbr.rel (%p113) target = $region12
      $region11: #{_module_parallel_forward.1} parent=5 // pred_region
        %s117 = ssub.s32 %s9, 1
        // Predicated region
        $region13: #{_module_parallel_forward.1} parent=11 // pred_check
          %p118 = pneg %p56
        $region14: #{_module_parallel_forward.1} parent=11 // pred_check_branch
          %120 = sbr.rel (%p118) target = $region16
        $region15: #{_module_parallel_forward.1} parent=11 // pred_region
          _
        $region16: #{_module_parallel_forward.1} parent=11 // pred_fallthru
          _
        // Predicated region
        $region17: #{_module_parallel_forward.1} parent=11 // pred_check
          %p121 = pneg %p77
        $region18: #{_module_parallel_forward.1} parent=11 // pred_check_branch
          %123 = sbr.rel (%p121) target = $region20
        $region19: #{_module_parallel_forward.1} parent=11 // pred_region
          _
        $region20: #{_module_parallel_forward.1} parent=11 // pred_fallthru
          _
      $region12: #{_module_parallel_forward.1} parent=5 // pred_fallthru
        _
      %p124 = scmp.lt.s32.totalorder %s9, 2
      // Predicated region
      $region21: #{_module_parallel_forward.1} parent=5 // pred_check
        %p125 = pneg %p124
      $region22: #{_module_parallel_forward.1} parent=5 // pred_check_branch
        %127 = sbr.rel (%p125) target = $region24
      $region23: #{_module_parallel_forward.1} parent=5 // pred_region
        // Predicated region
        $region25: #{_module_parallel_forward.1} parent=23 // pred_check
          %p128 = pneg %p29
        $region26: #{_module_parallel_forward.1} parent=23 // pred_check_branch
          %130 = sbr.rel (%p128) target = $region28
        $region27: #{_module_parallel_forward.1} parent=23 // pred_region
          %s131 = sand.u32 %s19, 1
          %s132 = sand.u32 %s19, 1
          %s133 = smul.addr %s132, 80
          %s134 = scalar_lea.vmem [#allocation2], %s133
          %s135 = smul.u32 4, %s9
          %s136 = smul.addr %s135, 4
          %s137 = scalar_lea.vmem %s0, %s136
          // Predicated region
          $region29: #{_module_parallel_forward.1} parent=27 // pred_check
            _
          $region30: #{_module_parallel_forward.1} parent=27 // pred_check_branch
            %139 = sbr.rel (0) target = $region32
          $region31: #{_module_parallel_forward.1} parent=27 // pred_region
            // Predicated region
            $region33: #{_module_parallel_forward.1} parent=31 // pred_check
              _
            $region34: #{_module_parallel_forward.1} parent=31 // pred_check_branch
              %141 = sbr.rel (0) target = $region36
            $region35: #{_module_parallel_forward.1} parent=31 // pred_region
              loop: start=0, step=1, limit=1
              $region37: #{_module_parallel_forward.1} parent=35 // loop_pre_header
                _
              $region38: #{_module_parallel_forward.1} parent=35 // loop_header
                %s143 = sphi 0, %s147
                %p144 = scmp.ge.s32.totalorder %s143, 1
                %s148 = sphi %s137, %s137
                %s149 = sphi %s134, %s134
              $region39: #{_module_parallel_forward.1} parent=35 // loop_header_branch
                %146 = sbr.rel (%p144) target = $region43
              $region40: #{_module_parallel_forward.1} parent=35 // loop_body
                %v150 = vld [vmem:[%s148] sm:$0xff]
                %151 = vst [vmem:[%s149] sm:$0xff] %v150
                %v152 = vld [vmem:[%s148 + $0x8] sm:$0xff]
                %153 = vst [vmem:[%s149 + $0x8] sm:$0xff] %v152
                %v154 = vld [vmem:[%s148 + $0x20] sm:$0xff]
                %155 = vst [vmem:[%s149 + $0x10] sm:$0xff] %v154
                %v156 = vld [vmem:[%s148 + $0x28] sm:$0xff]
                %157 = vst [vmem:[%s149 + $0x18] sm:$0xff] %v156
                %v158 = vld [vmem:[%s148 + $0x40] sm:$0xff]
                %159 = vst [vmem:[%s149 + $0x20] sm:$0xff] %v158
                %v160 = vld [vmem:[%s148 + $0x48] sm:$0xff]
                %161 = vst [vmem:[%s149 + $0x28] sm:$0xff] %v160
                %v162 = vld [vmem:[%s148 + $0x60] sm:$0xff]
                %163 = vst [vmem:[%s149 + $0x30] sm:$0xff] %v162
                %v164 = vld [vmem:[%s148 + $0x68] sm:$0xff]
                %165 = vst [vmem:[%s149 + $0x38] sm:$0xff] %v164
                %v166 = vld [vmem:[%s148 + $0x80] sm:$0xff]
                %167 = vst [vmem:[%s149 + $0x40] sm:$0xff] %v166
                %v168 = vld [vmem:[%s148 + $0x88] sm:$0xff]
                %169 = vst [vmem:[%s149 + $0x48] sm:$0xff] %v168
              $region41: #{_module_parallel_forward.1} parent=35 // loop_footer
                %s147 = sadd.s32 1, %s143
              $region42: #{_module_parallel_forward.1} parent=35 // loop_footer_branch
                %142 = sbr.rel target = $region38
              $region43: #{_module_parallel_forward.1} parent=35 // loop_exit
                _
            $region36: #{_module_parallel_forward.1} parent=31 // pred_fallthru
              _
            // Predicated region
            $region44: #{_module_parallel_forward.1} parent=31 // pred_check
              _
            $region45: #{_module_parallel_forward.1} parent=31 // pred_check_branch
              %171 = sbr.rel target = $region47
            $region46: #{_module_parallel_forward.1} parent=31 // pred_region
              _
            $region47: #{_module_parallel_forward.1} parent=31 // pred_fallthru
              _
          $region32: #{_module_parallel_forward.1} parent=27 // pred_fallthru
            _
          %172 = vnop
        $region28: #{_module_parallel_forward.1} parent=23 // pred_fallthru
          _
      $region24: #{_module_parallel_forward.1} parent=5 // pred_fallthru
        _
      %p173 = scmp.le.s32.totalorder 1, %s9
      %p174 = scmp.lt.s32.totalorder %s9, 3
      %p175 = pnand %p173, %p174
      %p176 = pneg %p175
      // Predicated region
      $region48: #{_module_parallel_forward.1} parent=5 // pred_check
        _
      $region49: #{_module_parallel_forward.1} parent=5 // pred_check_branch
        %178 = sbr.rel (%p175) target = $region51
      $region50: #{_module_parallel_forward.1} parent=5 // pred_region
        %s179 = ssub.s32 %s9, 1
        %s180 = sand.u32 %s22, 1
        %s181 = sand.u32 %s22, 1
        %s182 = smul.addr %s181, 80
        %s183 = scalar_lea.vmem [#allocation2], %s182
        // Predicated region
        $region52: #{_module_parallel_forward.1} parent=50 // pred_check
          %p184 = pneg %p35
        $region53: #{_module_parallel_forward.1} parent=50 // pred_check_branch
          %186 = sbr.rel (%p184) target = $region55
        $region54: #{_module_parallel_forward.1} parent=50 // pred_region
          _
        $region55: #{_module_parallel_forward.1} parent=50 // pred_fallthru
          _
        %s187 = sand.u32 %s22, 1
        %s188 = sand.u32 %s22, 1
        %s189 = smul.addr %s188, 80
        %s190 = scalar_lea.vmem [#allocation2], %s189
        %p191 = pneg %p35
        %p192 = pneg %p32
        %p193 = pneg %p56
        %p194 = pneg %p53
        %p195 = pneg %p77
        %p196 = pneg %p74
        %p197 = pneg %p103
        %p198 = pneg %p100
        %s199 = smul.u32 4, %s14
        %p200 = scmp.lt.s32.totalorder %s199, 7
        %s201 = scalar_select %p200, %s199, 7
        %s202 = smul.addr %s201, 2
        %s203 = scalar_lea.vmem %s3, %s202
        %s204 = smul.u32 4, %s14
        %s205 = smul.u32 4, %s14
        %p206 = scmp.lt.s32.totalorder %s205, 7
        %s207 = scalar_select %p206, %s205, 7
        %s208 = smul.addr %s207, 2
        %s209 = scalar_lea.vmem %s3, %s208
        %s210 = smul.u32 4, %s14
        %v212 = vld [vmem:[%s1] sm:$0x3]
        %v213 = vld [vmem:[%s183] sm:$0xff]
        %v214 = vld [vmem:[%s183 + $0x8] sm:$0xff]
        %v215 = vld [vmem:[%s183 + $0x10] sm:$0xff]
        %v216 = vld [vmem:[%s183 + $0x18] sm:$0xff]
        %v217 = vld [vmem:[%s183 + $0x20] sm:$0xff]
        %v218 = vld [vmem:[%s183 + $0x28] sm:$0xff]
        %v219 = vld [vmem:[%s183 + $0x30] sm:$0xff]
        %v220 = vld [vmem:[%s183 + $0x38] sm:$0xff]
        %v221 = vld [vmem:[%s183 + $0x40] sm:$0x33]
        %v222 = vld [vmem:[%s183 + $0x48] sm:$0x33]
        %v223 = vld [vmem:[%s2] sm:$0xf]
        %225 = vset.pattern.permute.xlu0 0
        %226 = vperm.xlu0 %225, %v223
        %v227 = vpop.permute.xlu0 %226
        %v239 = vunpack.c.l.b16 %v213
        %v240 = vunpack.c.h.b16 %v213
        %v241 = vunpack.c.l.b16 %v214
        %v242 = vunpack.c.h.b16 %v214
        %v243 = vunpack.c.l.b16 %v215
        %v244 = vunpack.c.h.b16 %v215
        %v245 = vunpack.c.l.b16 %v216
        %v246 = vunpack.c.h.b16 %v216
        %v247 = vunpack.c.l.b16 %v217
        %v248 = vunpack.c.h.b16 %v217
        %v249 = vunpack.c.l.b16 %v218
        %v250 = vunpack.c.h.b16 %v218
        %v251 = vunpack.c.l.b16 %v219
        %v252 = vunpack.c.h.b16 %v219
        %v253 = vunpack.c.l.b16 %v220
        %v254 = vunpack.c.h.b16 %v220
        %v255 = vunpack.c.l.b16 %v221
        %v256 = vunpack.c.h.b16 %v221
        %v257 = vunpack.c.l.b16 %v222
        %v258 = vunpack.c.h.b16 %v222
        %v259 = vpack.c.b16 %v243, %v239
        %v260 = vpack.c.b16 %v244, %v240
        %v261 = vpack.c.b16 %v245, %v241
        %v262 = vpack.c.b16 %v246, %v242
        %v263 = vpack.c.b16 %v251, %v247
        %v264 = vpack.c.b16 %v252, %v248
        %v265 = vpack.c.b16 %v253, %v249
        %v266 = vpack.c.b16 %v254, %v250
        %v267 = vpack.c.b16 %v255, %v255
        %v268 = vpack.c.b16 %v256, %v256
        %v269 = vpack.c.b16 %v257, %v257
        %v270 = vpack.c.b16 %v258, %v258
        %vm279 = vcmask 293888
        %v281 = vsel %vm279, %v212, 0
        %vm283 = vcmask 1041408
        %v285 = vsel %vm283, %v267, 0
        %v288 = vsel %vm283, %v268, 0
        %v291 = vsel %vm283, %v269, 0
        %v294 = vsel %vm283, %v270, 0
        %296 = vmatprep.subr.bf16.mxu0 0
        %297 = vmatpush1.bf16.msra.mxu0 0
        %298 = vmatprep.subr.bf16.mxu0 0
        %299 = vmatpush1.bf16.msra.mxu0 0
        %300 = vmatprep.subr.bf16.mxu0 0
        %301 = vmatpush1.bf16.msra.mxu0 0
        %302 = vmatprep.subr.bf16.mxu0 0
        %303 = vmatpush1.bf16.msra.mxu0 0
        %304 = vmatprep.subr.bf16.mxu0 0
        %305 = vmatpush1.bf16.msra.mxu0 0
        %306 = vmatprep.subr.bf16.mxu0 %v288
        %307 = vmatpush1.bf16.msra.mxu0 %v285
        %308 = vmatprep.subr.bf16.mxu0 %v264
        %309 = vmatpush1.bf16.msra.mxu0 %v263
        %310 = vmatprep.subr.bf16.mxu0 %v260
        %311 = vmatpush1.bf16.msra.mxu0 %v259
        %312 = vmatprep.subr.bf16.mxu0 0
        %313 = vmatpush2.bf16.msra.mxu0 0
        %314 = vmatprep.subr.bf16.mxu0 0
        %315 = vmatpush2.bf16.msra.mxu0 0
        %316 = vmatprep.subr.bf16.mxu0 0
        %317 = vmatpush2.bf16.msra.mxu0 0
        %318 = vmatprep.subr.bf16.mxu0 0
        %319 = vmatpush2.bf16.msra.mxu0 0
        %320 = vmatprep.subr.bf16.mxu0 0
        %321 = vmatpush2.bf16.msra.mxu0 0
        %322 = vmatprep.subr.bf16.mxu0 0
        %323 = vmatpush2.bf16.msra.mxu0 0
        %324 = vmatprep.subr.bf16.mxu0 0
        %325 = vmatpush2.bf16.msra.mxu0 0
        %326 = vmatprep.subr.bf16.mxu0 0
        %327 = vmatpush2.bf16.msra.mxu0 0
        %328 = vmatprep.mubr.bf16.mxu0 0
        %329 = vmatmul.mubr.bf16.gmra.mxu0 %v281
        %v330 = vpop.f32.mrf.mxu0
        %v331 = vadd.f32 %v227, %v330
        %v332 = vpop.f32.mrf.mxu0
        %v333 = vadd.f32 %v227, %v332
        %v334 = vpop.f32.mrf.mxu0
        %v335 = vpop.f32.mrf.mxu0
        %336 = vdwg.mxu0
        %337 = vmatprep.subr.bf16.mxu0 0
        %338 = vmatpush1.bf16.msra.mxu0 0
        %339 = vmatprep.subr.bf16.mxu0 0
        %340 = vmatpush1.bf16.msra.mxu0 0
        %341 = vmatprep.subr.bf16.mxu0 0
        %342 = vmatpush1.bf16.msra.mxu0 0
        %343 = vmatprep.subr.bf16.mxu0 0
        %344 = vmatpush1.bf16.msra.mxu0 0
        %345 = vmatprep.subr.bf16.mxu0 0
        %346 = vmatpush1.bf16.msra.mxu0 0
        %347 = vmatprep.subr.bf16.mxu0 %v294
        %348 = vmatpush1.bf16.msra.mxu0 %v291
        %349 = vmatprep.subr.bf16.mxu0 %v266
        %350 = vmatpush1.bf16.msra.mxu0 %v265
        %351 = vmatprep.subr.bf16.mxu0 %v262
        %352 = vmatpush1.bf16.msra.mxu0 %v261
        %353 = vmatprep.subr.bf16.mxu0 0
        %354 = vmatpush2.bf16.msra.mxu0 0
        %355 = vmatprep.subr.bf16.mxu0 0
        %356 = vmatpush2.bf16.msra.mxu0 0
        %357 = vmatprep.subr.bf16.mxu0 0
        %358 = vmatpush2.bf16.msra.mxu0 0
        %359 = vmatprep.subr.bf16.mxu0 0
        %360 = vmatpush2.bf16.msra.mxu0 0
        %361 = vmatprep.subr.bf16.mxu0 0
        %362 = vmatpush2.bf16.msra.mxu0 0
        %363 = vmatprep.subr.bf16.mxu0 0
        %364 = vmatpush2.bf16.msra.mxu0 0
        %365 = vmatprep.subr.bf16.mxu0 0
        %366 = vmatpush2.bf16.msra.mxu0 0
        %367 = vmatprep.subr.bf16.mxu0 0
        %368 = vmatpush2.bf16.msra.mxu0 0
        %369 = vmatprep.mubr.bf16.mxu0 0
        %370 = vmatmul.mubr.bf16.gmra.mxu0 %v281
        %v371 = vpop.f32.mrf.mxu0
        %v372 = vadd.f32 %v227, %v371
        %v373 = vpop.f32.mrf.mxu0
        %v374 = vadd.f32 %v227, %v373
        %v375 = vpop.f32.mrf.mxu0
        %v376 = vpop.f32.mrf.mxu0
        %377 = vdwg.mxu0
        %v378 = vpack.c.bf16 %v331, %v331
        %v379 = vpack.c.bf16 %v333, %v333
        %v380 = vpack.c.bf16 %v372, %v372
        %v381 = vpack.c.bf16 %v374, %v374
        %v386 = vcombine.low %v378, %v379
        %v387 = vcombine.low %v380, %v381
        %v389 = vunpack.c.l.s4 1983009808
        %v390 = vunpack.c.0.s8 %v389
        %v391 = vlaneseq
        %v392 = vshrl.u32 %v391, 7
        %v393 = vsub.s32 %v390, %v392
        %v394 = vrot.slane %v386, %v393
        %v396 = vunpack.c.l.s4 1983009808
        %v397 = vunpack.c.0.s8 %v396
        %v398 = vlaneseq
        %v399 = vshrl.u32 %v398, 7
        %v400 = vsub.s32 %v397, %v399
        %v401 = vrot.slane %v387, %v400
        %v402 = vcombine.low %v394, %v401
        %404 = vst [vmem:[%s209] sm:$0xff] %v402
        %s405 = smul.u32 4, %s14
        %p406 = scmp.lt.s32.totalorder %s405, 7
        %s407 = scalar_select %p406, %s405, 7
        %s408 = smul.addr %s407, 2
        %s409 = scalar_lea.vmem %s3, %s408
        // Predicated region
        $region56: #{_module_parallel_forward.1} parent=50 // pred_check
          %p410 = pneg %p100
        $region57: #{_module_parallel_forward.1} parent=50 // pred_check_branch
          %412 = sbr.rel (%p410) target = $region59
        $region58: #{_module_parallel_forward.1} parent=50 // pred_region
          %s413 = smul.u32 4, %s14
        $region59: #{_module_parallel_forward.1} parent=50 // pred_fallthru
          _
      $region51: #{_module_parallel_forward.1} parent=5 // pred_fallthru
        _
      %p414 = scmp.le.s32.totalorder 2, %s9
      // Predicated region
      $region60: #{_module_parallel_forward.1} parent=5 // pred_check
        %p415 = pneg %p414
      $region61: #{_module_parallel_forward.1} parent=5 // pred_check_branch
        %417 = sbr.rel (%p415) target = $region63
      $region62: #{_module_parallel_forward.1} parent=5 // pred_region
        %s418 = ssub.s32 %s9, 2
        // Predicated region
        $region64: #{_module_parallel_forward.1} parent=62 // pred_check
          %p419 = pneg %p106
        $region65: #{_module_parallel_forward.1} parent=62 // pred_check_branch
          %421 = sbr.rel (%p419) target = $region67
        $region66: #{_module_parallel_forward.1} parent=62 // pred_region
          %s422 = smul.u32 4, %s15
          %p423 = scmp.lt.s32.totalorder %s422, 7
          %s424 = scalar_select %p423, %s422, 7
          %s425 = smul.addr %s424, 2
          %s426 = scalar_lea.vmem %s3, %s425
        $region67: #{_module_parallel_forward.1} parent=62 // pred_fallthru
          _
      $region63: #{_module_parallel_forward.1} parent=5 // pred_fallthru
        _
    $region6: #{_module_parallel_forward.1} parent=1 // loop_footer
      %s13 = sadd.s32 1, %s9
    $region7: #{_module_parallel_forward.1} parent=1 // loop_footer_branch
      %8 = sbr.rel target = $region3
    $region8: #{_module_parallel_forward.1} parent=1 // loop_exit
      _

</llo_original>
